<compile_context>
chip_gen: v7x
topology: tpu7x:2x2x1
jax: 0.10.0
libtpu: 0.0.40
codegen_flags: <defaults>
</compile_context>

<pallas_src>
import math

import jax
import jax.numpy as jnp
from jax.experimental import pallas as pl
from jax.experimental.pallas import tpu as pltpu


def mlp_kernel(x_ref,
               w1_ref, b1_ref,
               w2_ref, b2_ref,
               w3_ref, b3_ref,
               w4_ref, b4_ref,
               o_ref):
    """Fused forward over one TILE_B-row block of the batch."""
    # In-kernel bf16 cast of the MXU operand (saves a wrapper-side HBM pass).
    x = x_ref[...].astype(jnp.bfloat16)                   # (TILE_B, 53)

    # layer 1: bf16 x bf16 MXU matmul, f32 accumulate, f32 bias + ReLU
    h1 = jnp.dot(x, w1_ref[...], preferred_element_type=jnp.float32)
    h1 = jnp.maximum(h1 + b1_ref[...], 0.0)

    # layer 2
    h2 = jnp.dot(h1.astype(jnp.bfloat16), w2_ref[...],
                 preferred_element_type=jnp.float32)
    h2 = jnp.maximum(h2 + b2_ref[...], 0.0)

    # layer 3
    h3 = jnp.dot(h2.astype(jnp.bfloat16), w3_ref[...],
                 preferred_element_type=jnp.float32)
    h3 = jnp.maximum(h3 + b3_ref[...], 0.0)

    # layer 4 (out_features == 1): VPU multiply + XLU lane reduction instead
    # of a nearly empty MXU pass.  w4 is stored as a (1, 32) f32 row.
    h4 = jnp.sum(h3 * w4_ref[...], axis=-1, keepdims=True) + b4_ref[...]

    o_ref[...] = h4.astype(o_ref.dtype)                   # (TILE_B, 1) f32


def _round_up(a, m):
    return ((a + m - 1) // m) * m


def mynetwork2_forward(x, params, tile_b=2048):
    """x: (B, 53) float.  params: dict (see init_params).  Returns (B, 1) f32."""
    B, F = x.shape
    assert F == 53, F

    # Batch tile: multiple of 8 (sublane), capped by the (rounded-up) batch.
    tile = _round_up(min(tile_b, _round_up(B, 8)), 8)
    grid = (pl.cdiv(B, tile),)   # ragged trailing block handled by Pallas

    args = (
        x,
        params["w1"], params["b1"],
        params["w2"], params["b2"],
        params["w3"], params["b3"],
        params["w4"], params["b4"],
    )

    in_specs = [
        # x: streamed per batch tile (double-buffered by the pipeline)
        pl.BlockSpec((tile, 53), lambda i: (i, 0)),
        # weights / biases: constant index_map -> fetched once, VMEM-resident
        pl.BlockSpec((53, 32), lambda i: (0, 0)),
        pl.BlockSpec((1, 32), lambda i: (0, 0)),
        pl.BlockSpec((32, 64), lambda i: (0, 0)),
        pl.BlockSpec((1, 64), lambda i: (0, 0)),
        pl.BlockSpec((64, 32), lambda i: (0, 0)),
        pl.BlockSpec((1, 32), lambda i: (0, 0)),
        pl.BlockSpec((1, 32), lambda i: (0, 0)),   # w4 row (f32)
        pl.BlockSpec((1, 1), lambda i: (0, 0)),    # b4
    ]
    out_specs = pl.BlockSpec((tile, 1), lambda i: (i, 0))

    flops = 2 * B * (53 * 32 + 32 * 64 + 64 * 32 + 32)
    bytes_accessed = (B * 53 * x.dtype.itemsize            # x read
                      + B * 4                              # out write
                      + (53 * 32 + 32 * 64 + 64 * 32) * 2  # bf16 weights
                      + (32 + 64 + 32 + 32 + 1) * 4)       # w4 row + biases

    return pl.pallas_call(
        mlp_kernel,
        out_shape=jax.ShapeDtypeStruct((B, 1), jnp.float32),
        grid=grid,
        in_specs=in_specs,
        out_specs=out_specs,
        compiler_params=pltpu.CompilerParams(
            dimension_semantics=("parallel",)),    # megacore split on v7x
        cost_estimate=pl.CostEstimate(
            flops=flops, transcendentals=0, bytes_accessed=bytes_accessed),
    )(*args)


def init_params(key):
    """PyTorch-default-style init (uniform(+-1/sqrt(fan_in))).
    w1..w3 stored bf16 (in, out) as MXU operands; w4 as a (1, 32) f32 row for
    the VPU reduction; biases f32 (1, out)."""
    dims = [(53, 32), (32, 64), (64, 32), (32, 1)]
    params = {}
    keys = jax.random.split(key, 2 * len(dims))
    for i, (fan_in, fan_out) in enumerate(dims):
        bound = 1.0 / math.sqrt(fan_in)
        w = jax.random.uniform(keys[2 * i], (fan_in, fan_out),
                               minval=-bound, maxval=bound, dtype=jnp.float32)
        b = jax.random.uniform(keys[2 * i + 1], (1, fan_out),
                               minval=-bound, maxval=bound, dtype=jnp.float32)
        if i < 3:
            params[f"w{i + 1}"] = w.astype(jnp.bfloat16)
        else:
            params[f"w{i + 1}"] = w.reshape(1, fan_in)     # (1, 32) f32 row
        params[f"b{i + 1}"] = b
    return params


def reference_forward(x, params):
    """Pure-JAX reference emulating the kernel's bf16 operand casts."""
    def q(a):  # bf16 round-trip (matmul operand precision)
        return a.astype(jnp.bfloat16).astype(jnp.float32)

    h = jnp.maximum(q(x) @ q(params["w1"]) + params["b1"], 0.0)
    h = jnp.maximum(q(h) @ q(params["w2"]) + params["b2"], 0.0)
    h = jnp.maximum(q(h) @ q(params["w3"]) + params["b3"], 0.0)
    return jnp.sum(h * params["w4"], axis=-1, keepdims=True) + params["b4"]


if __name__ == "__main__":
    key = jax.random.PRNGKey(0)
    kx, kp = jax.random.split(key)
    params = init_params(kp)

    # 1) small aligned batch (single grid step)
    batch = 8
    x = jax.random.normal(kx, (batch, 53), dtype=jnp.float32)
    out = jax.block_until_ready(mynetwork2_forward(x, params))
    ref = reference_forward(x, params)
    assert out.shape == (batch, 1), out.shape
    assert jnp.allclose(out, ref, atol=1e-4, rtol=1e-3), "mismatch (aligned)"

    # 2) ragged batch (not a multiple of the sublane/tile -> exercises the
    #    padded trailing block; no wrapper-side copy of x is made)
    batch2 = 50
    x2 = jax.random.normal(kx, (batch2, 53), dtype=jnp.float32)
    out2 = jax.block_until_ready(mynetwork2_forward(x2, params))
    ref2 = reference_forward(x2, params)
    assert out2.shape == (batch2, 1), out2.shape
    assert jnp.allclose(out2, ref2, atol=1e-4, rtol=1e-3), "mismatch (ragged)"

    # 3) multi-step grid with a small tile (weights stay VMEM-resident across steps)
    batch3 = 64
    x3 = jax.random.normal(kx, (batch3, 53), dtype=jnp.float32)
    out3 = jax.block_until_ready(mynetwork2_forward(x3, params, tile_b=16))
    ref3 = reference_forward(x3, params)
    assert out3.shape == (batch3, 1), out3.shape
    assert jnp.allclose(out3, ref3, atol=1e-4, rtol=1e-3), "mismatch (gridded)"

    print("KERNEL_OK")
</pallas_src>

<mosaic_0001>
module attributes {stable_mosaic.version = 11 : i64} {
  func.func @mlp_kernel(%arg0: i32, %arg1: memref<8x53xf32, #tpu.memory_space<vmem>>, %arg2: memref<53x32xbf16, #tpu.memory_space<vmem>>, %arg3: memref<1x32xf32, #tpu.memory_space<vmem>>, %arg4: memref<32x64xbf16, #tpu.memory_space<vmem>>, %arg5: memref<1x64xf32, #tpu.memory_space<vmem>>, %arg6: memref<64x32xbf16, #tpu.memory_space<vmem>>, %arg7: memref<1x32xf32, #tpu.memory_space<vmem>>, %arg8: memref<1x32xf32, #tpu.memory_space<vmem>>, %arg9: memref<1x1xf32, #tpu.memory_space<vmem>>, %arg10: memref<8x1xf32, #tpu.memory_space<vmem>>) attributes {dimension_semantics = [#tpu.dimension_semantics<parallel>], iteration_bounds = array<i64: 1>, scalar_prefetch = 0 : i64, scratch_operands = 0 : i64, tpu.core_type = #tpu.core_type<tc>, window_params = [{transform_indices = @transform_0, window_bounds = array<i64: 8, 53>}, {pipeline_mode = #tpu.pipeline_mode<synchronous>, transform_indices = @transform_1, window_bounds = array<i64: 53, 32>}, {pipeline_mode = #tpu.pipeline_mode<synchronous>, transform_indices = @transform_2, window_bounds = array<i64: 1, 32>}, {pipeline_mode = #tpu.pipeline_mode<synchronous>, transform_indices = @transform_3, window_bounds = array<i64: 32, 64>}, {pipeline_mode = #tpu.pipeline_mode<synchronous>, transform_indices = @transform_4, window_bounds = array<i64: 1, 64>}, {pipeline_mode = #tpu.pipeline_mode<synchronous>, transform_indices = @transform_5, window_bounds = array<i64: 64, 32>}, {pipeline_mode = #tpu.pipeline_mode<synchronous>, transform_indices = @transform_6, window_bounds = array<i64: 1, 32>}, {pipeline_mode = #tpu.pipeline_mode<synchronous>, transform_indices = @transform_7, window_bounds = array<i64: 1, 32>}, {pipeline_mode = #tpu.pipeline_mode<synchronous>, transform_indices = @transform_8, window_bounds = array<i64: 1, 1>}, {transform_indices = @transform_9, window_bounds = array<i64: 8, 1>}]} {
    %c0 = arith.constant 0 : index
    %c0_0 = arith.constant 0 : index
    %0 = vector.load %arg1[%c0, %c0_0] : memref<8x53xf32, #tpu.memory_space<vmem>>, vector<8x53xf32>
    %1 = arith.truncf %0 : vector<8x53xf32> to vector<8x53xbf16>
    %c0_1 = arith.constant 0 : index
    %c0_2 = arith.constant 0 : index
    %2 = vector.load %arg2[%c0_1, %c0_2] : memref<53x32xbf16, #tpu.memory_space<vmem>>, vector<53x32xbf16>
    %cst = arith.constant dense<0.000000e+00> : vector<8x32xf32>
    %3 = tpu.matmul %1, %2, %cst {dimension_numbers = #tpu.dot_dimension_numbers<[1], [0], [0], [1], [0, 0, 1, 1], [], []>} : vector<8x53xbf16>, vector<53x32xbf16>, vector<8x32xf32> -> vector<8x32xf32>
    %c0_3 = arith.constant 0 : index
    %c0_4 = arith.constant 0 : index
    %4 = vector.load %arg3[%c0_3, %c0_4] : memref<1x32xf32, #tpu.memory_space<vmem>>, vector<1x32xf32>
    %5 = vector.broadcast %4 : vector<1x32xf32> to vector<8x32xf32>
    %6 = arith.addf %3, %5 : vector<8x32xf32>
    %cst_5 = arith.constant 0.000000e+00 : f32
    %7 = vector.broadcast %cst_5 : f32 to vector<8x32xf32>
    %8 = arith.maximumf %6, %7 : vector<8x32xf32>
    %9 = arith.truncf %8 : vector<8x32xf32> to vector<8x32xbf16>
    %c0_6 = arith.constant 0 : index
    %c0_7 = arith.constant 0 : index
    %10 = vector.load %arg4[%c0_6, %c0_7] : memref<32x64xbf16, #tpu.memory_space<vmem>>, vector<32x64xbf16>
    %cst_8 = arith.constant dense<0.000000e+00> : vector<8x64xf32>
    %11 = tpu.matmul %9, %10, %cst_8 {dimension_numbers = #tpu.dot_dimension_numbers<[1], [0], [0], [1], [0, 0, 1, 1], [], []>} : vector<8x32xbf16>, vector<32x64xbf16>, vector<8x64xf32> -> vector<8x64xf32>
    %c0_9 = arith.constant 0 : index
    %c0_10 = arith.constant 0 : index
    %12 = vector.load %arg5[%c0_9, %c0_10] : memref<1x64xf32, #tpu.memory_space<vmem>>, vector<1x64xf32>
    %13 = vector.broadcast %12 : vector<1x64xf32> to vector<8x64xf32>
    %14 = arith.addf %11, %13 : vector<8x64xf32>
    %cst_11 = arith.constant 0.000000e+00 : f32
    %15 = vector.broadcast %cst_11 : f32 to vector<8x64xf32>
    %16 = arith.maximumf %14, %15 : vector<8x64xf32>
    %17 = arith.truncf %16 : vector<8x64xf32> to vector<8x64xbf16>
    %c0_12 = arith.constant 0 : index
    %c0_13 = arith.constant 0 : index
    %18 = vector.load %arg6[%c0_12, %c0_13] : memref<64x32xbf16, #tpu.memory_space<vmem>>, vector<64x32xbf16>
    %cst_14 = arith.constant dense<0.000000e+00> : vector<8x32xf32>
    %19 = tpu.matmul %17, %18, %cst_14 {dimension_numbers = #tpu.dot_dimension_numbers<[1], [0], [0], [1], [0, 0, 1, 1], [], []>} : vector<8x64xbf16>, vector<64x32xbf16>, vector<8x32xf32> -> vector<8x32xf32>
    %c0_15 = arith.constant 0 : index
    %c0_16 = arith.constant 0 : index
    %20 = vector.load %arg7[%c0_15, %c0_16] : memref<1x32xf32, #tpu.memory_space<vmem>>, vector<1x32xf32>
    %21 = vector.broadcast %20 : vector<1x32xf32> to vector<8x32xf32>
    %22 = arith.addf %19, %21 : vector<8x32xf32>
    %cst_17 = arith.constant 0.000000e+00 : f32
    %23 = vector.broadcast %cst_17 : f32 to vector<8x32xf32>
    %24 = arith.maximumf %22, %23 : vector<8x32xf32>
    %c0_18 = arith.constant 0 : index
    %c0_19 = arith.constant 0 : index
    %25 = vector.load %arg8[%c0_18, %c0_19] : memref<1x32xf32, #tpu.memory_space<vmem>>, vector<1x32xf32>
    %26 = vector.broadcast %25 : vector<1x32xf32> to vector<8x32xf32>
    %27 = arith.mulf %24, %26 : vector<8x32xf32>
    %cst_20 = arith.constant dense<0.000000e+00> : vector<8xf32>
    %28 = vector.multi_reduction <add>, %27, %cst_20 [1] : vector<8x32xf32> to vector<8xf32>
    %29 = vector.shape_cast %28 : vector<8xf32> to vector<8x1xf32>
    %c0_21 = arith.constant 0 : index
    %c0_22 = arith.constant 0 : index
    %30 = vector.load %arg9[%c0_21, %c0_22] : memref<1x1xf32, #tpu.memory_space<vmem>>, vector<1x1xf32>
    %31 = vector.broadcast %30 : vector<1x1xf32> to vector<8x1xf32>
    %32 = arith.addf %29, %31 : vector<8x1xf32>
    %c0_23 = arith.constant 0 : index
    %c0_24 = arith.constant 0 : index
    %33 = vector.load %arg10[%c0_23, %c0_24] : memref<8x1xf32, #tpu.memory_space<vmem>>, vector<8x1xf32>
    tpu.vector_store %arg10[%c0_23, %c0_24], %32 {strides = array<i32>} : memref<8x1xf32, #tpu.memory_space<vmem>>, vector<8x1xf32>,
    return
  }
  func.func @transform_0(%arg0: i32) -> (i32, i32) {
    %c0_i32 = arith.constant 0 : i32
    %c0_i32_0 = arith.constant 0 : i32
    return %arg0, %c0_i32 : i32, i32
  }
  func.func @transform_1(%arg0: i32) -> (i32, i32) {
    %c0_i32 = arith.constant 0 : i32
    %c0_i32_0 = arith.constant 0 : i32
    %c0_i32_1 = arith.constant 0 : i32
    return %c0_i32, %c0_i32_0 : i32, i32
  }
  func.func @transform_2(%arg0: i32) -> (i32, i32) {
    %c0_i32 = arith.constant 0 : i32
    %c0_i32_0 = arith.constant 0 : i32
    %c0_i32_1 = arith.constant 0 : i32
    return %c0_i32, %c0_i32_0 : i32, i32
  }
  func.func @transform_3(%arg0: i32) -> (i32, i32) {
    %c0_i32 = arith.constant 0 : i32
    %c0_i32_0 = arith.constant 0 : i32
    %c0_i32_1 = arith.constant 0 : i32
    return %c0_i32, %c0_i32_0 : i32, i32
  }
  func.func @transform_4(%arg0: i32) -> (i32, i32) {
    %c0_i32 = arith.constant 0 : i32
    %c0_i32_0 = arith.constant 0 : i32
    %c0_i32_1 = arith.constant 0 : i32
    return %c0_i32, %c0_i32_0 : i32, i32
  }
  func.func @transform_5(%arg0: i32) -> (i32, i32) {
    %c0_i32 = arith.constant 0 : i32
    %c0_i32_0 = arith.constant 0 : i32
    %c0_i32_1 = arith.constant 0 : i32
    return %c0_i32, %c0_i32_0 : i32, i32
  }
  func.func @transform_6(%arg0: i32) -> (i32, i32) {
    %c0_i32 = arith.constant 0 : i32
    %c0_i32_0 = arith.constant 0 : i32
    %c0_i32_1 = arith.constant 0 : i32
    return %c0_i32, %c0_i32_0 : i32, i32
  }
  func.func @transform_7(%arg0: i32) -> (i32, i32) {
    %c0_i32 = arith.constant 0 : i32
    %c0_i32_0 = arith.constant 0 : i32
    %c0_i32_1 = arith.constant 0 : i32
    return %c0_i32, %c0_i32_0 : i32, i32
  }
  func.func @transform_8(%arg0: i32) -> (i32, i32) {
    %c0_i32 = arith.constant 0 : i32
    %c0_i32_0 = arith.constant 0 : i32
    %c0_i32_1 = arith.constant 0 : i32
    return %c0_i32, %c0_i32_0 : i32, i32
  }
  func.func @transform_9(%arg0: i32) -> (i32, i32) {
    %c0_i32 = arith.constant 0 : i32
    %c0_i32_0 = arith.constant 0 : i32
    return %arg0, %c0_i32 : i32, i32
  }
}

</mosaic_0001>

<llo_original>
// kernel: tpu_custom_call.1
$region0: #{tpu_custom_call.1}
  #allocation0 [shape = 'u32[]', space=smem, size = 0x4, offset = 0x4, fixed_abs, tag = 'smem constant byte address 0x4 - core index']
  #allocation1 [shape = 'u32[144,128]{1,0:T(1,128)}', space=vmem, size = 0x12000, scoped, tag = 'internal scratch']
  #allocation2 [shape = 'f32[1,1]{1,0:T(1,128)S(1)}', space=vmem, size = 0x200, scoped, tag = 'scoped memory for tpu_custom_call.1']
  %s0 = inlined_call_operand.vmem [shape: f32[8,53], index: 0, kind: input, shape index: {}]
  %s1 = inlined_call_operand.vmem [shape: bf16[53,32], index: 1, kind: input, shape index: {}]
  %s2 = inlined_call_operand.vmem [shape: f32[1,32], index: 2, kind: input, shape index: {}]
  %s3 = inlined_call_operand.vmem [shape: bf16[32,64], index: 3, kind: input, shape index: {}]
  %s4 = inlined_call_operand.vmem [shape: f32[1,64], index: 4, kind: input, shape index: {}]
  %s5 = inlined_call_operand.vmem [shape: bf16[64,32], index: 5, kind: input, shape index: {}]
  %s6 = inlined_call_operand.vmem [shape: f32[1,32], index: 6, kind: input, shape index: {}]
  %s7 = inlined_call_operand.vmem [shape: f32[1,32], index: 7, kind: input, shape index: {}]
  %s8 = inlined_call_operand.<no memory space> [shape: f32[1,1], index: 8, kind: input, shape index: {}]
  %s9 = inlined_call_operand.vmem [shape: f32[8,1], index: 9, kind: output, shape index: {}]
  %s10 = sld [smem:[#allocation0]]
  $region46: #{tpu_custom_call.1} parent=0
    _
  %s12 = ssub.s32 1, %s10
  %s13 = scalar_select 0, %s12, %s10
  %v14 = vstv %s8
  %15 = vst [vmem:[#allocation2] sm:$0x1] %v14
  // Predicated region
  $region2: #{tpu_custom_call.1} parent=0 // pred_check
    _
  $region3: #{tpu_custom_call.1} parent=0 // pred_check_branch
    %17 = sbr.rel (0) target = $region5
  $region4: #{tpu_custom_call.1} parent=0 // pred_region
    _
  $region5: #{tpu_custom_call.1} parent=0 // pred_fallthru
    _
  // Predicated region
  $region6: #{tpu_custom_call.1} parent=0 // pred_check
    _
  $region7: #{tpu_custom_call.1} parent=0 // pred_check_branch
    %19 = sbr.rel (0) target = $region9
  $region8: #{tpu_custom_call.1} parent=0 // pred_region
    _
  $region9: #{tpu_custom_call.1} parent=0 // pred_fallthru
    _
  // Predicated region
  $region10: #{tpu_custom_call.1} parent=0 // pred_check
    _
  $region11: #{tpu_custom_call.1} parent=0 // pred_check_branch
    %21 = sbr.rel (0) target = $region13
  $region12: #{tpu_custom_call.1} parent=0 // pred_region
    _
  $region13: #{tpu_custom_call.1} parent=0 // pred_fallthru
    _
  // Predicated region
  $region14: #{tpu_custom_call.1} parent=0 // pred_check
    _
  $region15: #{tpu_custom_call.1} parent=0 // pred_check_branch
    %23 = sbr.rel (0) target = $region17
  $region16: #{tpu_custom_call.1} parent=0 // pred_region
    _
  $region17: #{tpu_custom_call.1} parent=0 // pred_fallthru
    _
  // Predicated region
  $region18: #{tpu_custom_call.1} parent=0 // pred_check
    _
  $region19: #{tpu_custom_call.1} parent=0 // pred_check_branch
    %25 = sbr.rel (0) target = $region21
  $region20: #{tpu_custom_call.1} parent=0 // pred_region
    _
  $region21: #{tpu_custom_call.1} parent=0 // pred_fallthru
    _
  // Predicated region
  $region22: #{tpu_custom_call.1} parent=0 // pred_check
    _
  $region23: #{tpu_custom_call.1} parent=0 // pred_check_branch
    %27 = sbr.rel (0) target = $region25
  $region24: #{tpu_custom_call.1} parent=0 // pred_region
    _
  $region25: #{tpu_custom_call.1} parent=0 // pred_fallthru
    _
  // Predicated region
  $region26: #{tpu_custom_call.1} parent=0 // pred_check
    _
  $region27: #{tpu_custom_call.1} parent=0 // pred_check_branch
    %29 = sbr.rel (0) target = $region29
  $region28: #{tpu_custom_call.1} parent=0 // pred_region
    _
  $region29: #{tpu_custom_call.1} parent=0 // pred_fallthru
    _
  // Predicated region
  $region30: #{tpu_custom_call.1} parent=0 // pred_check
    _
  $region31: #{tpu_custom_call.1} parent=0 // pred_check_branch
    %31 = sbr.rel (0) target = $region33
  $region32: #{tpu_custom_call.1} parent=0 // pred_region
    _
  $region33: #{tpu_custom_call.1} parent=0 // pred_fallthru
    _
  // Predicated region
  $region34: #{tpu_custom_call.1} parent=0 // pred_check
    _
  $region35: #{tpu_custom_call.1} parent=0 // pred_check_branch
    %33 = sbr.rel (0) target = $region37
  $region36: #{tpu_custom_call.1} parent=0 // pred_region
    _
  $region37: #{tpu_custom_call.1} parent=0 // pred_fallthru
    _
  %v35 = vld [vmem:[%s0] sm:$0xff]
  %v36 = vpack.c.bf16 %v35, %v35
  %v37 = vld [vmem:[%s1] sm:$0xf]
  %v38 = vld [vmem:[%s1 + $0x4] sm:$0xf]
  %v39 = vld [vmem:[%s1 + $0x8] sm:$0xf]
  %v40 = vld [vmem:[%s1 + $0xc] sm:$0xf]
  %v41 = vld [vmem:[%s1 + $0x10] sm:$0xf]
  %v42 = vld [vmem:[%s1 + $0x14] sm:$0xf]
  %v43 = vld [vmem:[%s1 + $0x18] sm:$0x7]
  %v44 = vld [vmem:[%s2] sm:$0x1]
  %v46 = vlaneseq
  %v47 = vshrl.u32 %v46, 7
  %v48 = vsub.s32 0, %v47
  %v49 = vrot.slane %v44, %v48
  %v58 = vunpack.c.l.b16 %v37
  %v59 = vunpack.c.l.b16 %v38
  %v60 = vunpack.c.l.b16 %v39
  %v61 = vunpack.c.l.b16 %v40
  %v62 = vunpack.c.l.b16 %v41
  %v63 = vunpack.c.l.b16 %v42
  %v64 = vunpack.c.l.b16 %v43
  %v65 = vpack.c.b16 %v59, %v58
  %v66 = vpack.c.b16 %v61, %v60
  %v67 = vpack.c.b16 %v63, %v62
  %v68 = vpack.c.b16 %v64, %v64
  %vm72 = vcmask 433152
  %v74 = vsel %vm72, %v36, 0
  %vm76 = vcmask 1041408
  %vm77 = vcmask 1042432
  %v78 = vsel %vm76, 4294967295, 65535
  %v79 = vsel %vm77, %v78, 0
  %v81 = vand.u32 %v68, %v79
  %83 = vmatprep.subr.bf16.mxu0 0
  %84 = vmatpush1.bf16.msra.mxu0 %v65
  %85 = vmatprep.subr.bf16.mxu0 0
  %86 = vmatpush1.bf16.msra.mxu0 %v66
  %87 = vmatprep.subr.bf16.mxu0 0
  %88 = vmatpush1.bf16.msra.mxu0 %v67
  %89 = vmatprep.subr.bf16.mxu0 0
  %90 = vmatpush1.bf16.msra.mxu0 %v81
  %91 = vmatprep.subr.bf16.mxu0 0
  %92 = vmatpush1.bf16.msra.mxu0 0
  %93 = vmatprep.subr.bf16.mxu0 0
  %94 = vmatpush1.bf16.msra.mxu0 0
  %95 = vmatprep.subr.bf16.mxu0 0
  %96 = vmatpush1.bf16.msra.mxu0 0
  %97 = vmatprep.subr.bf16.mxu0 0
  %98 = vmatpush1.bf16.msra.mxu0 0
  %99 = vmatprep.subr.bf16.mxu0 0
  %100 = vmatpush1.bf16.msra.mxu0 0
  %101 = vmatprep.subr.bf16.mxu0 0
  %102 = vmatpush1.bf16.msra.mxu0 0
  %103 = vmatprep.subr.bf16.mxu0 0
  %104 = vmatpush1.bf16.msra.mxu0 0
  %105 = vmatprep.subr.bf16.mxu0 0
  %106 = vmatpush1.bf16.msra.mxu0 0
  %107 = vmatprep.subr.bf16.mxu0 0
  %108 = vmatpush1.bf16.msra.mxu0 0
  %109 = vmatprep.subr.bf16.mxu0 0
  %110 = vmatpush1.bf16.msra.mxu0 0
  %111 = vmatprep.subr.bf16.mxu0 0
  %112 = vmatpush1.bf16.msra.mxu0 0
  %113 = vmatprep.subr.bf16.mxu0 0
  %114 = vmatpush1.bf16.msra.mxu0 0
  %115 = vmatprep.mubr.bf16.mxu0 0
  %116 = vmatmul.mubr.bf16.gmra.mrb[0].mxu0 %v74
  %v117 = vpop.f32.mrb[0].mxu0
  %v118 = vadd.f32 %v49, %v117
  %v119 = vpop.f32.mrb[0].mxu0
  %v120 = vpop.f32.mrb[0].mxu0
  %v121 = vpop.f32.mrb[0].mxu0
  %122 = vdwg.mxu0
  %v123 = vmax.f32 %v118, 0.0
  %v124 = vpack.c.bf16 %v123, %v123
  %v125 = vld [vmem:[%s3] sm:$0xf]
  %v126 = vld [vmem:[%s3 + $0x4] sm:$0xf]
  %v127 = vld [vmem:[%s3 + $0x8] sm:$0xf]
  %v128 = vld [vmem:[%s3 + $0xc] sm:$0xf]
  %v129 = vld [vmem:[%s4] sm:$0x1]
  %v131 = vlaneseq
  %v132 = vshrl.u32 %v131, 7
  %v133 = vsub.s32 0, %v132
  %v134 = vrot.slane %v129, %v133
  %v140 = vunpack.c.l.b16 %v125
  %v141 = vunpack.c.l.b16 %v126
  %v142 = vunpack.c.l.b16 %v127
  %v143 = vunpack.c.l.b16 %v128
  %v144 = vpack.c.b16 %v141, %v140
  %v145 = vpack.c.b16 %v143, %v142
  %vm148 = vcmask 261120
  %v150 = vsel %vm148, %v124, 0
  %152 = vmatprep.subr.bf16.mxu0 0
  %153 = vmatpush1.bf16.msra.mxu0 %v144
  %154 = vmatprep.subr.bf16.mxu0 0
  %155 = vmatpush1.bf16.msra.mxu0 %v145
  %156 = vmatprep.subr.bf16.mxu0 0
  %157 = vmatpush1.bf16.msra.mxu0 0
  %158 = vmatprep.subr.bf16.mxu0 0
  %159 = vmatpush1.bf16.msra.mxu0 0
  %160 = vmatprep.subr.bf16.mxu0 0
  %161 = vmatpush1.bf16.msra.mxu0 0
  %162 = vmatprep.subr.bf16.mxu0 0
  %163 = vmatpush1.bf16.msra.mxu0 0
  %164 = vmatprep.subr.bf16.mxu0 0
  %165 = vmatpush1.bf16.msra.mxu0 0
  %166 = vmatprep.subr.bf16.mxu0 0
  %167 = vmatpush1.bf16.msra.mxu0 0
  %168 = vmatprep.subr.bf16.mxu0 0
  %169 = vmatpush1.bf16.msra.mxu0 0
  %170 = vmatprep.subr.bf16.mxu0 0
  %171 = vmatpush1.bf16.msra.mxu0 0
  %172 = vmatprep.subr.bf16.mxu0 0
  %173 = vmatpush1.bf16.msra.mxu0 0
  %174 = vmatprep.subr.bf16.mxu0 0
  %175 = vmatpush1.bf16.msra.mxu0 0
  %176 = vmatprep.subr.bf16.mxu0 0
  %177 = vmatpush1.bf16.msra.mxu0 0
  %178 = vmatprep.subr.bf16.mxu0 0
  %179 = vmatpush1.bf16.msra.mxu0 0
  %180 = vmatprep.subr.bf16.mxu0 0
  %181 = vmatpush1.bf16.msra.mxu0 0
  %182 = vmatprep.subr.bf16.mxu0 0
  %183 = vmatpush1.bf16.msra.mxu0 0
  %184 = vmatprep.mubr.bf16.mxu0 0
  %185 = vmatmul.mubr.bf16.gmra.mrb[0].mxu0 %v150
  %v186 = vpop.f32.mrb[0].mxu0
  %v187 = vadd.f32 %v134, %v186
  %v188 = vpop.f32.mrb[0].mxu0
  %v189 = vpop.f32.mrb[0].mxu0
  %v190 = vpop.f32.mrb[0].mxu0
  %191 = vdwg.mxu0
  %v192 = vmax.f32 %v187, 0.0
  %v193 = vpack.c.bf16 %v192, %v192
  %v194 = vld [vmem:[%s5] sm:$0xf]
  %v195 = vld [vmem:[%s5 + $0x4] sm:$0xf]
  %v196 = vld [vmem:[%s5 + $0x8] sm:$0xf]
  %v197 = vld [vmem:[%s5 + $0xc] sm:$0xf]
  %v198 = vld [vmem:[%s5 + $0x10] sm:$0xf]
  %v199 = vld [vmem:[%s5 + $0x14] sm:$0xf]
  %v200 = vld [vmem:[%s5 + $0x18] sm:$0xf]
  %v201 = vld [vmem:[%s5 + $0x1c] sm:$0xf]
  %v202 = vld [vmem:[%s6] sm:$0x1]
  %v204 = vlaneseq
  %v205 = vshrl.u32 %v204, 7
  %v206 = vsub.s32 0, %v205
  %v207 = vrot.slane %v202, %v206
  %v217 = vunpack.c.l.b16 %v194
  %v218 = vunpack.c.l.b16 %v195
  %v219 = vunpack.c.l.b16 %v196
  %v220 = vunpack.c.l.b16 %v197
  %v221 = vunpack.c.l.b16 %v198
  %v222 = vunpack.c.l.b16 %v199
  %v223 = vunpack.c.l.b16 %v200
  %v224 = vunpack.c.l.b16 %v201
  %v225 = vpack.c.b16 %v218, %v217
  %v226 = vpack.c.b16 %v220, %v219
  %v227 = vpack.c.b16 %v222, %v221
  %v228 = vpack.c.b16 %v224, %v223
  %vm233 = vcmask 523264
  %v235 = vsel %vm233, %v193, 0
  %237 = vmatprep.subr.bf16.mxu0 0
  %238 = vmatpush1.bf16.msra.mxu0 %v225
  %239 = vmatprep.subr.bf16.mxu0 0
  %240 = vmatpush1.bf16.msra.mxu0 %v226
  %241 = vmatprep.subr.bf16.mxu0 0
  %242 = vmatpush1.bf16.msra.mxu0 %v227
  %243 = vmatprep.subr.bf16.mxu0 0
  %244 = vmatpush1.bf16.msra.mxu0 %v228
  %245 = vmatprep.subr.bf16.mxu0 0
  %246 = vmatpush1.bf16.msra.mxu0 0
  %247 = vmatprep.subr.bf16.mxu0 0
  %248 = vmatpush1.bf16.msra.mxu0 0
  %249 = vmatprep.subr.bf16.mxu0 0
  %250 = vmatpush1.bf16.msra.mxu0 0
  %251 = vmatprep.subr.bf16.mxu0 0
  %252 = vmatpush1.bf16.msra.mxu0 0
  %253 = vmatprep.subr.bf16.mxu0 0
  %254 = vmatpush1.bf16.msra.mxu0 0
  %255 = vmatprep.subr.bf16.mxu0 0
  %256 = vmatpush1.bf16.msra.mxu0 0
  %257 = vmatprep.subr.bf16.mxu0 0
  %258 = vmatpush1.bf16.msra.mxu0 0
  %259 = vmatprep.subr.bf16.mxu0 0
  %260 = vmatpush1.bf16.msra.mxu0 0
  %261 = vmatprep.subr.bf16.mxu0 0
  %262 = vmatpush1.bf16.msra.mxu0 0
  %263 = vmatprep.subr.bf16.mxu0 0
  %264 = vmatpush1.bf16.msra.mxu0 0
  %265 = vmatprep.subr.bf16.mxu0 0
  %266 = vmatpush1.bf16.msra.mxu0 0
  %267 = vmatprep.subr.bf16.mxu0 0
  %268 = vmatpush1.bf16.msra.mxu0 0
  %269 = vmatprep.mubr.bf16.mxu0 0
  %270 = vmatmul.mubr.bf16.gmra.mrb[0].mxu0 %v235
  %v271 = vpop.f32.mrb[0].mxu0
  %v272 = vadd.f32 %v207, %v271
  %v273 = vpop.f32.mrb[0].mxu0
  %v274 = vpop.f32.mrb[0].mxu0
  %v275 = vpop.f32.mrb[0].mxu0
  %276 = vdwg.mxu0
  %v277 = vmax.f32 %v272, 0.0
  %v278 = vld [vmem:[%s7] sm:$0x1]
  %v280 = vlaneseq
  %v281 = vshrl.u32 %v280, 7
  %v282 = vsub.s32 0, %v281
  %v283 = vrot.slane %v278, %v282
  %v285 = vmul.f32 %v277, %v283
  %v286 = vsel %vm148, %v285, 0.0
  %287 = vadd.xlane.f32.xlu0 %v286
  %v288 = vpop.xlane.xlu0 %287
  %v289 = vld [vmem:[#allocation2] sm:$0x1]
  %v291 = vlaneseq
  %v292 = vshrl.u32 %v291, 7
  %v293 = vsub.s32 0, %v292
  %v294 = vrot.slane %v289, %v293
  %v296 = vadd.f32 %v288, %v294
  %vm297 = vcmask 7168
  %298 = vst.msk [vmem:[%s9] sm:$0xff] %vm297, %v296
  // Predicated region
  $region38: #{tpu_custom_call.1} parent=0 // pred_check
    _
  $region39: #{tpu_custom_call.1} parent=0 // pred_check_branch
    %300 = sbr.rel (0) target = $region41
  $region40: #{tpu_custom_call.1} parent=0 // pred_region
    _
  $region41: #{tpu_custom_call.1} parent=0 // pred_fallthru
    _
  // Predicated region
  $region42: #{tpu_custom_call.1} parent=0 // pred_check
    _
  $region43: #{tpu_custom_call.1} parent=0 // pred_check_branch
    %302 = sbr.rel (0) target = $region45
  $region44: #{tpu_custom_call.1} parent=0 // pred_region
    _
  $region45: #{tpu_custom_call.1} parent=0 // pred_fallthru
    _

</llo_original>
